<compile_context>
chip_gen: v5e
topology: v5e:2x2
jax: 0.10.0
libtpu: 0.0.40
codegen_flags: <defaults>
</compile_context>

<pallas_src>
import numpy as np
import jax
import jax.numpy as jnp
from jax.experimental import pallas as pl
from jax.experimental.pallas import tpu as pltpu


def _embedding_tables(in_channels, n_freqs, logscale):
    """Trace-time (NumPy) per-output-column scale / phase / identity-mask tables."""
    if logscale:
        freqs = (2.0 ** np.arange(n_freqs, dtype=np.float64)).astype(np.float32)
    else:
        freqs = np.linspace(1.0, 2.0 ** (n_freqs - 1), n_freqs).astype(np.float32)

    C = in_channels
    c_out = C * (2 * n_freqs + 1)

    scale = np.zeros((C, c_out), np.float32)   # z = x @ scale + phase
    phase = np.zeros((1, c_out), np.float32)   # 0 for identity/sin cols, pi/2 for cos cols
    is_id = np.zeros((1, c_out), np.int32)     # 1 for identity (copy-of-x) columns

    for c in range(C):                         # identity block: out[:, c] = x[:, c]
        scale[c, c] = 1.0
        is_id[0, c] = 1

    half_pi = np.float32(np.pi / 2.0)
    for k, f in enumerate(freqs):
        sin0 = C * (2 * k + 1)
        cos0 = C * (2 * k + 2)
        for c in range(C):
            scale[c, sin0 + c] = f
            scale[c, cos0 + c] = f
        phase[0, cos0:cos0 + C] = half_pi      # cos(t) = sin(t + pi/2)

    return jnp.asarray(scale), jnp.asarray(phase), jnp.asarray(is_id), c_out


def _embedding_kernel(x_ref, scale_ref, phase_ref, is_id_ref, o_ref):
    # x_ref: (Bt, C)   scale_ref: (C, C_out)   phase/is_id: (1, C_out)
    # o_ref: (Bt, C_out)
    x = x_ref[...].astype(jnp.float32)

    # Channel replication + frequency scaling on the (otherwise idle) MXU.
    z = jnp.dot(x, scale_ref[...],
                precision=jax.lax.Precision.HIGHEST,
                preferred_element_type=jnp.float32)          # (Bt, C_out)
    z = z + phase_ref[...]                                   # fold cos into sin

    s = jnp.sin(z)                                           # single EUP transcendental/elem
    out = jnp.where(is_id_ref[...] != 0, z, s)               # identity columns: z == x exactly
    o_ref[...] = out.astype(o_ref.dtype)                     # one dense store per tile


def _choose_block_b(B, C, c_out, requested):
    """8-row-aligned batch tile, VMEM-budgeted, with >=2 grid steps when possible."""
    if B <= 8:
        return B
    bb = 8192 if requested is None else requested
    bb = max(8, (min(bb, B) // 8) * 8)

    # Cap at ~B/2 (8-aligned) so the single "parallel" axis shards across both
    # v7x TensorCores instead of collapsing to one grid step.
    half = max(8, ((B // 2) // 8) * 8)
    bb = min(bb, half)

    # VMEM budget with the lane-padding tax: both the (bb, C) input and the
    # (bb, c_out) output blocks occupy bb * ceil(dim/128)*128 * 4 bytes each.
    # Keep double-buffered in+out blocks under ~24 MiB; temporaries and the
    # tables live in the remaining headroom of the 48 MiB scoped limit.
    lane_pad = lambda n: ((n + 127) // 128) * 128
    per_row_bytes = 4 * (lane_pad(C) + lane_pad(c_out))
    budget = 24 * 1024 * 1024
    max_rows = max(8, ((budget // (2 * per_row_bytes)) // 8) * 8)
    return min(bb, max_rows)


def embedding_forward(x, n_freqs, logscale=True, block_b=None):
    """x: (B, in_channels) -> (B, in_channels * (2*n_freqs + 1)).

    Output column order matches PyTorch: [x, sin(f0 x), cos(f0 x), sin(f1 x), ...].
    """
    B, C = x.shape
    scale, phase, is_id, c_out = _embedding_tables(C, n_freqs, logscale)

    bb = _choose_block_b(B, C, c_out, block_b)
    grid = (pl.cdiv(B, bb),)

    cost = pl.CostEstimate(
        flops=2 * B * C * c_out + 2 * B * c_out,
        transcendentals=B * c_out,
        bytes_accessed=4 * B * (C + c_out) + 4 * c_out * (C + 2),
    )

    return pl.pallas_call(
        _embedding_kernel,
        out_shape=jax.ShapeDtypeStruct((B, c_out), x.dtype),
        grid=grid,
        in_specs=[
            pl.BlockSpec((bb, C), lambda i: (i, 0)),
            pl.BlockSpec((C, c_out), lambda i: (0, 0)),
            pl.BlockSpec((1, c_out), lambda i: (0, 0)),
            pl.BlockSpec((1, c_out), lambda i: (0, 0)),
        ],
        out_specs=pl.BlockSpec((bb, c_out), lambda i: (i, 0)),
        compiler_params=pltpu.CompilerParams(
            dimension_semantics=("parallel",),           # megacore-shardable on v7x
            vmem_limit_bytes=48 * 1024 * 1024,
        ),
        cost_estimate=cost,
    )(x, scale, phase, is_id)


def _reference_forward(x, n_freqs, logscale=True):
    """Pure-JAX reference with exactly the PyTorch ordering."""
    if logscale:
        freqs = (2.0 ** np.arange(n_freqs, dtype=np.float64)).astype(np.float32)
    else:
        freqs = np.linspace(1.0, 2.0 ** (n_freqs - 1), n_freqs).astype(np.float32)
    outs = [x]
    for f in freqs:
        outs.append(jnp.sin(f * x))
        outs.append(jnp.cos(f * x))
    return jnp.concatenate(outs, axis=-1)


if __name__ == "__main__":
    key = jax.random.PRNGKey(0)
    k1, k2 = jax.random.split(key)

    # 1) NeRF xyz embedding: Embedding(3, 10); coordinates normalized to [-1, 1].
    B1, C1, NF1 = 32, 3, 10
    x1 = jax.random.uniform(k1, (B1, C1), jnp.float32, minval=-1.0, maxval=1.0)
    out1 = jax.block_until_ready(embedding_forward(x1, NF1, logscale=True))
    ref1 = jax.block_until_ready(_reference_forward(x1, NF1, logscale=True))
    assert out1.shape == (B1, C1 * (2 * NF1 + 1))
    # cos computed as sin(z + pi/2): at |z| <= ~512 the argument rounding costs
    # up to ~6e-5 absolute, so the tolerance is slightly looser here.
    err1 = np.max(np.abs(np.asarray(out1) - np.asarray(ref1)))
    assert np.allclose(np.asarray(out1), np.asarray(ref1), atol=5e-4, rtol=1e-4), err1

    # 2) Direction embedding: Embedding(3, 4), logscale=False, partial edge block.
    B2, C2, NF2 = 20, 3, 4
    x2 = jax.random.normal(k2, (B2, C2), jnp.float32)
    out2 = jax.block_until_ready(embedding_forward(x2, NF2, logscale=False))
    ref2 = jax.block_until_ready(_reference_forward(x2, NF2, logscale=False))
    assert out2.shape == (B2, C2 * (2 * NF2 + 1))
    err2 = np.max(np.abs(np.asarray(out2) - np.asarray(ref2)))
    assert np.allclose(np.asarray(out2), np.asarray(ref2), atol=5e-5, rtol=1e-5), err2

    print("KERNEL_OK")
</pallas_src>

<mosaic_0001>
module attributes {stable_mosaic.version = 11 : i64} {
  func.func @_embedding_kernel(%arg0: i32, %arg1: memref<16x3xf32, #tpu.memory_space<vmem>>, %arg2: memref<3x63xf32, #tpu.memory_space<vmem>>, %arg3: memref<1x63xf32, #tpu.memory_space<vmem>>, %arg4: memref<1x63xi32, #tpu.memory_space<vmem>>, %arg5: memref<16x63xf32, #tpu.memory_space<vmem>>) attributes {dimension_semantics = [#tpu.dimension_semantics<parallel>], iteration_bounds = array<i64: 2>, scalar_prefetch = 0 : i64, scratch_operands = 0 : i64, tpu.core_type = #tpu.core_type<tc>, window_params = [{transform_indices = @transform_0, window_bounds = array<i64: 16, 3>}, {pipeline_mode = #tpu.pipeline_mode<synchronous>, transform_indices = @transform_1, window_bounds = array<i64: 3, 63>}, {pipeline_mode = #tpu.pipeline_mode<synchronous>, transform_indices = @transform_2, window_bounds = array<i64: 1, 63>}, {pipeline_mode = #tpu.pipeline_mode<synchronous>, transform_indices = @transform_3, window_bounds = array<i64: 1, 63>}, {transform_indices = @transform_4, window_bounds = array<i64: 16, 63>}]} {
    %c0 = arith.constant 0 : index
    %c0_0 = arith.constant 0 : index
    %0 = vector.load %arg1[%c0, %c0_0] : memref<16x3xf32, #tpu.memory_space<vmem>>, vector<16x3xf32>
    %c0_1 = arith.constant 0 : index
    %c0_2 = arith.constant 0 : index
    %1 = vector.load %arg2[%c0_1, %c0_2] : memref<3x63xf32, #tpu.memory_space<vmem>>, vector<3x63xf32>
    %cst = arith.constant dense<0.000000e+00> : vector<16x63xf32>
    %2 = tpu.matmul %0, %1, %cst {dimension_numbers = #tpu.dot_dimension_numbers<[1], [0], [0], [1], [0, 0, 1, 1], [], []>, precision = #tpu.contract_precision<fp32>} : vector<16x3xf32>, vector<3x63xf32>, vector<16x63xf32> -> vector<16x63xf32>
    %c0_3 = arith.constant 0 : index
    %c0_4 = arith.constant 0 : index
    %3 = vector.load %arg3[%c0_3, %c0_4] : memref<1x63xf32, #tpu.memory_space<vmem>>, vector<1x63xf32>
    %4 = vector.broadcast %3 : vector<1x63xf32> to vector<16x63xf32>
    %5 = arith.addf %2, %4 : vector<16x63xf32>
    %6 = math.sin %5 : vector<16x63xf32>
    %c0_5 = arith.constant 0 : index
    %c0_6 = arith.constant 0 : index
    %7 = vector.load %arg4[%c0_5, %c0_6] : memref<1x63xi32, #tpu.memory_space<vmem>>, vector<1x63xi32>
    %c0_i32 = arith.constant 0 : i32
    %8 = vector.broadcast %c0_i32 : i32 to vector<1x63xi32>
    %9 = arith.cmpi ne, %7, %8 : vector<1x63xi32>
    %10 = vector.shape_cast %9 : vector<1x63xi1> to vector<1x63xi1>
    %11 = vector.broadcast %10 : vector<1x63xi1> to vector<16x63xi1>
    %12 = arith.select %11, %5, %6 : vector<16x63xi1>, vector<16x63xf32>
    %c0_7 = arith.constant 0 : index
    %c0_8 = arith.constant 0 : index
    %13 = vector.load %arg5[%c0_7, %c0_8] : memref<16x63xf32, #tpu.memory_space<vmem>>, vector<16x63xf32>
    tpu.vector_store %arg5[%c0_7, %c0_8], %12 {strides = array<i32>} : memref<16x63xf32, #tpu.memory_space<vmem>>, vector<16x63xf32>,
    return
  }
  func.func @transform_0(%arg0: i32) -> (i32, i32) {
    %c0_i32 = arith.constant 0 : i32
    %c0_i32_0 = arith.constant 0 : i32
    return %arg0, %c0_i32 : i32, i32
  }
  func.func @transform_1(%arg0: i32) -> (i32, i32) {
    %c0_i32 = arith.constant 0 : i32
    %c0_i32_0 = arith.constant 0 : i32
    %c0_i32_1 = arith.constant 0 : i32
    return %c0_i32, %c0_i32_0 : i32, i32
  }
  func.func @transform_2(%arg0: i32) -> (i32, i32) {
    %c0_i32 = arith.constant 0 : i32
    %c0_i32_0 = arith.constant 0 : i32
    %c0_i32_1 = arith.constant 0 : i32
    return %c0_i32, %c0_i32_0 : i32, i32
  }
  func.func @transform_3(%arg0: i32) -> (i32, i32) {
    %c0_i32 = arith.constant 0 : i32
    %c0_i32_0 = arith.constant 0 : i32
    %c0_i32_1 = arith.constant 0 : i32
    return %c0_i32, %c0_i32_0 : i32, i32
  }
  func.func @transform_4(%arg0: i32) -> (i32, i32) {
    %c0_i32 = arith.constant 0 : i32
    %c0_i32_0 = arith.constant 0 : i32
    return %arg0, %c0_i32 : i32, i32
  }
}

</mosaic_0001>

<llo_original>
// kernel: tpu_custom_call.1
$region0: #{tpu_custom_call.1}
  #allocation0 [shape = 'u32[]', space=smem, size = 0x4, offset = 0x4, fixed_abs, tag = 'smem constant byte address 0x4 - core index']
  #allocation1 [shape = 'u32[72,128]{1,0:T(1,128)}', space=vmem, size = 0x9000, scoped, tag = 'internal scratch']
  %s0 = inlined_call_operand.vmem [shape: f32[32,3], index: 0, kind: input, shape index: {}]
  %s1 = inlined_call_operand.vmem [shape: f32[3,63], index: 1, kind: input, shape index: {}]
  %s2 = inlined_call_operand.vmem [shape: f32[1,63], index: 2, kind: input, shape index: {}]
  %s3 = inlined_call_operand.vmem [shape: s32[1,63], index: 3, kind: input, shape index: {}]
  %s4 = inlined_call_operand.hbm [shape: f32[32,63], index: 4, kind: output, shape index: {}]
  %s5 = sld [smem:[#allocation0]]
  $region49: #{tpu_custom_call.1} parent=0
    _
  %s7 = ssub.s32 1, %s5
  %s8 = scalar_select 0, %s7, %s5
  $region1: #{tpu_custom_call.1} parent=0
    #allocation2 [shape = 'u8[16384]{0}', space=vmem, size = 0x4000, scoped, tag = 'output window, operand 0']
    #allocation3 [shape = 's32[2]{0}', space=sflag, size = 0x8, scoped, tag = 'scoped memory for tpu_custom_call.1']
    %9 = vsyncpa [#allocation3], 0
    %s10 = scalar_lea.sflag [#allocation3], 1
    %11 = vsyncpa %s10, 0
    loop: start=0, step=1, limit=4
    $region2: #{tpu_custom_call.1} parent=1 // loop_pre_header
      _
    $region3: #{tpu_custom_call.1} parent=1 // loop_header
      %s13 = sphi 0, %s17
      %p14 = scmp.ge.s32.totalorder %s13, 4
      %s23 = sphi 0, %s25
      %s26 = sphi 0, %s23
      %s27 = sphi 0, %s26
      %s43 = sphi 0, %s27
      %s47 = sphi 0, %s47
      %s49 = sphi 0, %s47
      %s50 = sphi 0, %s49
      %s64 = sphi 0, %s50
      %s68 = sphi 0, %s68
      %s70 = sphi 0, %s68
      %s71 = sphi 0, %s70
      %s85 = sphi 0, %s71
      %s89 = sphi 0, %s89
      %s91 = sphi 0, %s89
      %s92 = sphi 0, %s91
      %s106 = sphi 0, %s92
      %s112 = sphi 0, %s114
      %s115 = sphi 0, %s112
      %s116 = sphi 0, %s115
      %s132 = sphi 0, %s116
    $region4: #{tpu_custom_call.1} parent=1 // loop_header_branch
      %16 = sbr.rel (%p14) target = $region8
    $region5: #{tpu_custom_call.1} parent=1 // loop_body
      %s18 = ssub.s32 %s13, 1
      %s19 = ssub.s32 %s13, 2
      %s20 = sadd.s32 %s13, 1
      %s21 = ssub.s32 %s13, %s20
      %p22 = scmp.eq.s32.totalorder %s21, 0
      %s24 = sadd.s32 %s23, 1
      %s25 = scalar_select %p22, %s23, %s24
      %p28 = pneg %p22
      %p29 = scmp.eq.s32.totalorder %s13, 1
      %p30 = por %p28, %p29
      %p31 = scmp.ne.s32.totalorder %s23, %s26
      %p32 = scmp.eq.s32.totalorder %s13, 0
      %p33 = por %p31, %p32
      %p34 = scmp.ne.s32.totalorder %s23, %s26
      %p35 = scmp.eq.s32.totalorder %s18, 1
      %p36 = por %p34, %p35
      %p37 = scmp.ne.s32.totalorder %s26, %s27
      %p38 = scmp.eq.s32.totalorder %s18, 0
      %p39 = por %p37, %p38
      %p40 = scmp.ne.s32.totalorder %s26, %s27
      %p41 = scmp.eq.s32.totalorder %s19, 1
      %p42 = por %p40, %p41
      %p44 = scmp.ne.s32.totalorder %s27, %s43
      %p45 = scmp.eq.s32.totalorder %s19, 0
      %p46 = por %p44, %p45
      %s48 = sadd.s32 %s47, 1
      %p51 = scmp.eq.s32.totalorder %s13, 1
      %p52 = scmp.ne.s32.totalorder %s47, %s49
      %p53 = scmp.eq.s32.totalorder %s13, 0
      %p54 = por %p52, %p53
      %p55 = scmp.ne.s32.totalorder %s47, %s49
      %p56 = scmp.eq.s32.totalorder %s18, 1
      %p57 = por %p55, %p56
      %p58 = scmp.ne.s32.totalorder %s49, %s50
      %p59 = scmp.eq.s32.totalorder %s18, 0
      %p60 = por %p58, %p59
      %p61 = scmp.ne.s32.totalorder %s49, %s50
      %p62 = scmp.eq.s32.totalorder %s19, 1
      %p63 = por %p61, %p62
      %p65 = scmp.ne.s32.totalorder %s50, %s64
      %p66 = scmp.eq.s32.totalorder %s19, 0
      %p67 = por %p65, %p66
      %s69 = sadd.s32 %s68, 1
      %p72 = scmp.eq.s32.totalorder %s13, 1
      %p73 = scmp.ne.s32.totalorder %s68, %s70
      %p74 = scmp.eq.s32.totalorder %s13, 0
      %p75 = por %p73, %p74
      %p76 = scmp.ne.s32.totalorder %s68, %s70
      %p77 = scmp.eq.s32.totalorder %s18, 1
      %p78 = por %p76, %p77
      %p79 = scmp.ne.s32.totalorder %s70, %s71
      %p80 = scmp.eq.s32.totalorder %s18, 0
      %p81 = por %p79, %p80
      %p82 = scmp.ne.s32.totalorder %s70, %s71
      %p83 = scmp.eq.s32.totalorder %s19, 1
      %p84 = por %p82, %p83
      %p86 = scmp.ne.s32.totalorder %s71, %s85
      %p87 = scmp.eq.s32.totalorder %s19, 0
      %p88 = por %p86, %p87
      %s90 = sadd.s32 %s89, 1
      %p93 = scmp.eq.s32.totalorder %s13, 1
      %p94 = scmp.ne.s32.totalorder %s89, %s91
      %p95 = scmp.eq.s32.totalorder %s13, 0
      %p96 = por %p94, %p95
      %p97 = scmp.ne.s32.totalorder %s89, %s91
      %p98 = scmp.eq.s32.totalorder %s18, 1
      %p99 = por %p97, %p98
      %p100 = scmp.ne.s32.totalorder %s91, %s92
      %p101 = scmp.eq.s32.totalorder %s18, 0
      %p102 = por %p100, %p101
      %p103 = scmp.ne.s32.totalorder %s91, %s92
      %p104 = scmp.eq.s32.totalorder %s19, 1
      %p105 = por %p103, %p104
      %p107 = scmp.ne.s32.totalorder %s92, %s106
      %p108 = scmp.eq.s32.totalorder %s19, 0
      %p109 = por %p107, %p108
      %s110 = ssub.s32 %s13, %s20
      %p111 = scmp.eq.s32.totalorder %s110, 0
      %s113 = sadd.s32 %s112, 1
      %s114 = scalar_select %p111, %s112, %s113
      %p117 = pneg %p111
      %p118 = scmp.eq.s32.totalorder %s13, 1
      %p119 = por %p117, %p118
      %p120 = scmp.ne.s32.totalorder %s112, %s115
      %p121 = scmp.eq.s32.totalorder %s13, 0
      %p122 = por %p120, %p121
      %p123 = scmp.ne.s32.totalorder %s112, %s115
      %p124 = scmp.eq.s32.totalorder %s18, 1
      %p125 = por %p123, %p124
      %p126 = scmp.ne.s32.totalorder %s115, %s116
      %p127 = scmp.eq.s32.totalorder %s18, 0
      %p128 = por %p126, %p127
      %p129 = scmp.ne.s32.totalorder %s115, %s116
      %p130 = scmp.eq.s32.totalorder %s19, 1
      %p131 = por %p129, %p130
      %p133 = scmp.ne.s32.totalorder %s116, %s132
      %p134 = scmp.eq.s32.totalorder %s19, 0
      %p135 = por %p133, %p134
      %p136 = scmp.le.s32.totalorder 1, %s13
      %p137 = scmp.lt.s32.totalorder %s13, 3
      %p138 = pnand %p136, %p137
      %p139 = pneg %p138
      // Predicated region
      $region9: #{tpu_custom_call.1} parent=5 // pred_check
        _
      $region10: #{tpu_custom_call.1} parent=5 // pred_check_branch
        %141 = sbr.rel (%p138) target = $region12
      $region11: #{tpu_custom_call.1} parent=5 // pred_region
        %s142 = ssub.s32 %s13, 1
        // Predicated region
        $region13: #{tpu_custom_call.1} parent=11 // pred_check
          %p143 = pneg %p60
        $region14: #{tpu_custom_call.1} parent=11 // pred_check_branch
          %145 = sbr.rel (%p143) target = $region16
        $region15: #{tpu_custom_call.1} parent=11 // pred_region
          _
        $region16: #{tpu_custom_call.1} parent=11 // pred_fallthru
          _
        // Predicated region
        $region17: #{tpu_custom_call.1} parent=11 // pred_check
          %p146 = pneg %p81
        $region18: #{tpu_custom_call.1} parent=11 // pred_check_branch
          %148 = sbr.rel (%p146) target = $region20
        $region19: #{tpu_custom_call.1} parent=11 // pred_region
          _
        $region20: #{tpu_custom_call.1} parent=11 // pred_fallthru
          _
        // Predicated region
        $region21: #{tpu_custom_call.1} parent=11 // pred_check
          %p149 = pneg %p102
        $region22: #{tpu_custom_call.1} parent=11 // pred_check_branch
          %151 = sbr.rel (%p149) target = $region24
        $region23: #{tpu_custom_call.1} parent=11 // pred_region
          _
        $region24: #{tpu_custom_call.1} parent=11 // pred_fallthru
          _
      $region12: #{tpu_custom_call.1} parent=5 // pred_fallthru
        _
      %p152 = scmp.lt.s32.totalorder %s13, 2
      // Predicated region
      $region25: #{tpu_custom_call.1} parent=5 // pred_check
        %p153 = pneg %p152
      $region26: #{tpu_custom_call.1} parent=5 // pred_check_branch
        %155 = sbr.rel (%p153) target = $region28
      $region27: #{tpu_custom_call.1} parent=5 // pred_region
        // Predicated region
        $region29: #{tpu_custom_call.1} parent=27 // pred_check
          %p156 = pneg %p33
        $region30: #{tpu_custom_call.1} parent=27 // pred_check_branch
          %158 = sbr.rel (%p156) target = $region32
        $region31: #{tpu_custom_call.1} parent=27 // pred_region
          %s159 = smul.u32 2, %s13
          %p160 = scmp.lt.s32.totalorder %s159, 3
          %s161 = scalar_select %p160, %s159, 3
          %s162 = smul.addr %s161, 8
          %s163 = scalar_lea.vmem %s0, %s162
          %s164 = smul.u32 2, %s13
        $region32: #{tpu_custom_call.1} parent=27 // pred_fallthru
          _
      $region28: #{tpu_custom_call.1} parent=5 // pred_fallthru
        _
      %p165 = scmp.le.s32.totalorder 1, %s13
      %p166 = scmp.lt.s32.totalorder %s13, 3
      %p167 = pnand %p165, %p166
      %p168 = pneg %p167
      // Predicated region
      $region33: #{tpu_custom_call.1} parent=5 // pred_check
        _
      $region34: #{tpu_custom_call.1} parent=5 // pred_check_branch
        %170 = sbr.rel (%p167) target = $region36
      $region35: #{tpu_custom_call.1} parent=5 // pred_region
        %s171 = ssub.s32 %s13, 1
        %s172 = smul.u32 2, %s18
        %p173 = scmp.lt.s32.totalorder %s172, 3
        %s174 = scalar_select %p173, %s172, 3
        %s175 = smul.addr %s174, 8
        %s176 = scalar_lea.vmem %s0, %s175
        %p177 = pneg %p39
        %p178 = pneg %p36
        %p179 = pneg %p60
        %p180 = pneg %p57
        %p181 = pneg %p81
        %p182 = pneg %p78
        %p183 = pneg %p102
        %p184 = pneg %p99
        %p185 = pneg %p128
        %p186 = pneg %p125
        %s187 = sand.u32 %s115, 1
        %s188 = scalar_lea.sflag [#allocation3], %s187
        %s189 = sand.u32 %s115, 1
        %s190 = smul.addr %s189, 16
        %s191 = scalar_lea.vmem [#allocation2], %s190
        %s192 = smul.u32 2, %s18
        %p193 = scmp.lt.s32.totalorder %s192, 3
        %s194 = scalar_select %p193, %s192, 3
        %s195 = smul.addr %s194, 8
        %s196 = scalar_lea.vmem %s0, %s195
        %s197 = smul.u32 2, %s18
        %s198 = smul.u32 2, %s18
        %v199 = vld [vmem:[%s196] sm:$0xff]
        %v200 = vld [vmem:[%s196 + $0x8] sm:$0xff]
        %v201 = vld [vmem:[%s1] sm:$0x7]
        %v202 = vld [vmem:[%s2] sm:$0x1]
        %v204 = vperm.slane %v202, 0
        %vm206 = vcmask 23552
        %v208 = vsel %vm206, %v199, 0
        %v211 = vsel %vm206, %v200, 0
        %vm213 = vcmask 1042432
        %v215 = vsel %vm213, %v201, 0
        %217 = vmatpush.msra.mxu0 0.0
        %218 = vmatpush.msra.mxu0 0.0
        %219 = vmatpush.msra.mxu0 0.0
        %220 = vmatpush.msra.mxu0 0.0
        %221 = vmatpush.msra.mxu0 0.0
        %222 = vmatpush.msra.mxu0 0.0
        %223 = vmatpush.msra.mxu0 0.0
        %224 = vmatpush.msra.mxu0 0.0
        %225 = vmatpush.msra.mxu0 0.0
        %226 = vmatpush.msra.mxu0 0.0
        %227 = vmatpush.msra.mxu0 0.0
        %228 = vmatpush.msra.mxu0 0.0
        %229 = vmatpush.msra.mxu0 0.0
        %230 = vmatpush.msra.mxu0 0.0
        %231 = vmatpush.msra.mxu0 0.0
        %v232 = vand.u32 %v215, 4294901760
        %233 = vmatpush.msra.mxu0 %v232
        %v234 = vand.u32 %v208, 4294901760
        %v235 = vsub.f32 %v208, %v234
        %v236 = vand.u32 %v235, 4294901760
        %v237 = vsub.f32 %v235, %v236
        %v238 = vand.u32 %v237, 4294901760
        %239 = vmatmul.f32.gmra.mxu0 %v238
        %v240 = vpop.f32.mrf.mxu0
        %v241 = vadd.f32 %v204, %v240
        %v242 = vand.u32 %v211, 4294901760
        %v243 = vsub.f32 %v211, %v242
        %v244 = vand.u32 %v243, 4294901760
        %v245 = vsub.f32 %v243, %v244
        %v246 = vand.u32 %v245, 4294901760
        %247 = vmatmul.f32.gmra.mxu0 %v246
        %v248 = vpop.f32.mrf.mxu0
        %v249 = vadd.f32 %v204, %v248
        %250 = vdwg.mxu0
        %251 = vmatpush.msra.mxu0 0.0
        %252 = vmatpush.msra.mxu0 0.0
        %253 = vmatpush.msra.mxu0 0.0
        %254 = vmatpush.msra.mxu0 0.0
        %255 = vmatpush.msra.mxu0 0.0
        %256 = vmatpush.msra.mxu0 0.0
        %257 = vmatpush.msra.mxu0 0.0
        %258 = vmatpush.msra.mxu0 0.0
        %259 = vmatpush.msra.mxu0 0.0
        %260 = vmatpush.msra.mxu0 0.0
        %261 = vmatpush.msra.mxu0 0.0
        %262 = vmatpush.msra.mxu0 0.0
        %263 = vmatpush.msra.mxu0 0.0
        %264 = vmatpush.msra.mxu0 0.0
        %265 = vmatpush.msra.mxu0 0.0
        %v266 = vand.u32 %v215, 4294901760
        %v267 = vsub.f32 %v215, %v266
        %v268 = vand.u32 %v267, 4294901760
        %v269 = vsub.f32 %v267, %v268
        %v270 = vand.u32 %v269, 4294901760
        %271 = vmatpush.msra.mxu0 %v270
        %v272 = vand.u32 %v208, 4294901760
        %273 = vmatmul.f32.gmra.mxu0 %v272
        %v274 = vpop.f32.mrf.mxu0
        %v275 = vadd.f32 %v241, %v274
        %v276 = vand.u32 %v211, 4294901760
        %277 = vmatmul.f32.gmra.mxu0 %v276
        %v278 = vpop.f32.mrf.mxu0
        %v279 = vadd.f32 %v249, %v278
        %280 = vdwg.mxu0
        %281 = vmatpush.msra.mxu0 0.0
        %282 = vmatpush.msra.mxu0 0.0
        %283 = vmatpush.msra.mxu0 0.0
        %284 = vmatpush.msra.mxu0 0.0
        %285 = vmatpush.msra.mxu0 0.0
        %286 = vmatpush.msra.mxu0 0.0
        %287 = vmatpush.msra.mxu0 0.0
        %288 = vmatpush.msra.mxu0 0.0
        %289 = vmatpush.msra.mxu0 0.0
        %290 = vmatpush.msra.mxu0 0.0
        %291 = vmatpush.msra.mxu0 0.0
        %292 = vmatpush.msra.mxu0 0.0
        %293 = vmatpush.msra.mxu0 0.0
        %294 = vmatpush.msra.mxu0 0.0
        %295 = vmatpush.msra.mxu0 0.0
        %v296 = vand.u32 %v215, 4294901760
        %v297 = vsub.f32 %v215, %v296
        %298 = vmatpush.msra.mxu0 %v297
        %v299 = vand.u32 %v208, 4294901760
        %v300 = vsub.f32 %v208, %v299
        %301 = vmatmul.f32.gmra.mxu0 %v300
        %v302 = vpop.f32.mrf.mxu0
        %v303 = vadd.f32 %v275, %v302
        %v304 = vand.u32 %v211, 4294901760
        %v305 = vsub.f32 %v211, %v304
        %306 = vmatmul.f32.gmra.mxu0 %v305
        %v307 = vpop.f32.mrf.mxu0
        %v308 = vadd.f32 %v279, %v307
        %309 = vdwg.mxu0
        %310 = vmatpush.msra.mxu0 0.0
        %311 = vmatpush.msra.mxu0 0.0
        %312 = vmatpush.msra.mxu0 0.0
        %313 = vmatpush.msra.mxu0 0.0
        %314 = vmatpush.msra.mxu0 0.0
        %315 = vmatpush.msra.mxu0 0.0
        %316 = vmatpush.msra.mxu0 0.0
        %317 = vmatpush.msra.mxu0 0.0
        %318 = vmatpush.msra.mxu0 0.0
        %319 = vmatpush.msra.mxu0 0.0
        %320 = vmatpush.msra.mxu0 0.0
        %321 = vmatpush.msra.mxu0 0.0
        %322 = vmatpush.msra.mxu0 0.0
        %323 = vmatpush.msra.mxu0 0.0
        %324 = vmatpush.msra.mxu0 0.0
        %v325 = vand.u32 %v215, 4294901760
        %326 = vmatpush.msra.mxu0 %v325
        %v327 = vand.u32 %v208, 4294901760
        %v328 = vsub.f32 %v208, %v327
        %v329 = vand.u32 %v328, 4294901760
        %330 = vmatmul.f32.gmra.mxu0 %v329
        %v331 = vpop.f32.mrf.mxu0
        %v332 = vadd.f32 %v303, %v331
        %v333 = vand.u32 %v211, 4294901760
        %v334 = vsub.f32 %v211, %v333
        %v335 = vand.u32 %v334, 4294901760
        %336 = vmatmul.f32.gmra.mxu0 %v335
        %v337 = vpop.f32.mrf.mxu0
        %v338 = vadd.f32 %v308, %v337
        %339 = vdwg.mxu0
        %340 = vmatpush.msra.mxu0 0.0
        %341 = vmatpush.msra.mxu0 0.0
        %342 = vmatpush.msra.mxu0 0.0
        %343 = vmatpush.msra.mxu0 0.0
        %344 = vmatpush.msra.mxu0 0.0
        %345 = vmatpush.msra.mxu0 0.0
        %346 = vmatpush.msra.mxu0 0.0
        %347 = vmatpush.msra.mxu0 0.0
        %348 = vmatpush.msra.mxu0 0.0
        %349 = vmatpush.msra.mxu0 0.0
        %350 = vmatpush.msra.mxu0 0.0
        %351 = vmatpush.msra.mxu0 0.0
        %352 = vmatpush.msra.mxu0 0.0
        %353 = vmatpush.msra.mxu0 0.0
        %354 = vmatpush.msra.mxu0 0.0
        %v355 = vand.u32 %v215, 4294901760
        %v356 = vsub.f32 %v215, %v355
        %v357 = vand.u32 %v356, 4294901760
        %358 = vmatpush.msra.mxu0 %v357
        %v359 = vand.u32 %v208, 4294901760
        %360 = vmatmul.f32.gmra.mxu0 %v359
        %v361 = vpop.f32.mrf.mxu0
        %v362 = vadd.f32 %v332, %v361
        %v363 = vand.u32 %v211, 4294901760
        %364 = vmatmul.f32.gmra.mxu0 %v363
        %v365 = vpop.f32.mrf.mxu0
        %v366 = vadd.f32 %v338, %v365
        %367 = vdwg.mxu0
        %368 = vmatpush.msra.mxu0 0.0
        %369 = vmatpush.msra.mxu0 0.0
        %370 = vmatpush.msra.mxu0 0.0
        %371 = vmatpush.msra.mxu0 0.0
        %372 = vmatpush.msra.mxu0 0.0
        %373 = vmatpush.msra.mxu0 0.0
        %374 = vmatpush.msra.mxu0 0.0
        %375 = vmatpush.msra.mxu0 0.0
        %376 = vmatpush.msra.mxu0 0.0
        %377 = vmatpush.msra.mxu0 0.0
        %378 = vmatpush.msra.mxu0 0.0
        %379 = vmatpush.msra.mxu0 0.0
        %380 = vmatpush.msra.mxu0 0.0
        %381 = vmatpush.msra.mxu0 0.0
        %382 = vmatpush.msra.mxu0 0.0
        %v383 = vand.u32 %v215, 4294901760
        %384 = vmatpush.msra.mxu0 %v383
        %v385 = vand.u32 %v208, 4294901760
        %386 = vmatmul.f32.gmra.mxu0 %v385
        %v387 = vpop.f32.mrf.mxu0
        %v388 = vadd.f32 %v362, %v387
        %v389 = vand.u32 %v211, 4294901760
        %390 = vmatmul.f32.gmra.mxu0 %v389
        %v391 = vpop.f32.mrf.mxu0
        %v392 = vadd.f32 %v366, %v391
        %393 = vdwg.mxu0
        %v394 = vand.u32 2147483647, %v388
        %vm395 = vcmp.le.f32.partialorder %v394, 0.7853982
        %vm396 = vcmp.lt.s32.totalorder %v388, 0
        %v397 = vand.u32 %v388, 2139095040
        %v398 = vshrl.u32 %v397, 23
        %v399 = vsub.s32 %v398, 127
        %v400 = vand.u32 2147483647, %v388
        %v401 = vand.u32 %v400, 8388607
        %v402 = vor.u32 %v401, 8388608
        %v403 = vsub.s32 0, %v402
        %v404 = vadd.s32 %v399, 1
        %vm405 = vcmp.gt.s32.totalorder %v404, 0
        %v406 = vsel %vm405, %v404, 0
        %v407 = vshrl.u32 %v406, 5
        %v408 = vand.u32 %v406, 31
        %v409 = vsub.s32 32, %v408
        %v410 = vshrl.u32 683565275, %v409
        %v411 = vshll.u32 683565275, %v408
        %v412 = vshrl.u32 2475754826, %v409
        %v413 = vor.u32 %v411, %v412
        %v414 = vshll.u32 2475754826, %v408
        %v415 = vshrl.u32 2131351028, %v409
        %v416 = vor.u32 %v414, %v415
        %v417 = vshll.u32 2131351028, %v408
        %v418 = vshrl.u32 2102212464, %v409
        %v419 = vor.u32 %v417, %v418
        %v420 = vshll.u32 2102212464, %v408
        %v421 = vshrl.u32 920167782, %v409
        %v422 = vor.u32 %v420, %v421
        %v423 = vshll.u32 920167782, %v408
        %v424 = vshrl.u32 1326507024, %v409
        %v425 = vor.u32 %v423, %v424
        %vm426 = vcmp.lt.s32.totalorder %v407, 1
        %vm427 = vcmp.lt.s32.totalorder %v407, 2
        %vm428 = vcmp.lt.s32.totalorder %v407, 3
        %vm429 = vcmp.lt.s32.totalorder %v407, 4
        %v430 = vsel %vm426, %v410, %v413
        %v431 = vsel %vm429, %v419, 2102212464
        %v432 = vsel %vm428, %v416, %v431
        %v433 = vsel %vm427, %v430, %v432
        %v434 = vsel %vm426, %v413, %v416
        %v435 = vsel %vm429, %v422, 920167782
        %v436 = vsel %vm428, %v419, %v435
        %v437 = vsel %vm427, %v434, %v436
        %v438 = vsel %vm426, %v416, %v419
        %v439 = vsel %vm429, %v425, 1326507024
        %v440 = vsel %vm428, %v422, %v439
        %v441 = vsel %vm427, %v438, %v440
        %v442 = vshll.u32 %v402, 8
        %v443 = vand.u32 %v442, 65535
        %v444 = vshrl.u32 %v442, 16
        %v445 = vand.u32 %v441, 65535
        %v446 = vshrl.u32 %v441, 16
        %v447 = vmul.u32 %v443, %v445
        %v448 = vmul.u32 %v443, %v446
        %v449 = vmul.u32 %v444, %v445
        %v450 = vmul.u32 %v444, %v446
        %v451 = vshll.u32 %v448, 16
        %v452 = vshrl.u32 %v448, 16
        %v453 = vshll.u32 %v449, 16
        %v454 = vshrl.u32 %v449, 16
        %vm455 = vc.u32 %v447, %v451
        %v456 = vsel %vm455, 1, 0
        %v457 = vadd.s32 %v447, %v451
        %v458 = vadd.s32 %v450, %v456
        %vm459 = vc.u32 %v457, %v453
        %v460 = vsel %vm459, 1, 0
        %v461 = vadd.s32 %v457, %v453
        %v462 = vadd.s32 %v458, %v460
        %v463 = vadd.s32 %v462, %v452
        %v464 = vadd.s32 %v463, %v454
        %v465 = vand.u32 %v442, 65535
        %v466 = vshrl.u32 %v442, 16
        %v467 = vand.u32 %v437, 65535
        %v468 = vshrl.u32 %v437, 16
        %v469 = vmul.u32 %v465, %v467
        %v470 = vmul.u32 %v465, %v468
        %v471 = vmul.u32 %v466, %v467
        %v472 = vmul.u32 %v466, %v468
        %v473 = vshll.u32 %v470, 16
        %v474 = vshrl.u32 %v470, 16
        %v475 = vshll.u32 %v471, 16
        %v476 = vshrl.u32 %v471, 16
        %vm477 = vc.u32 %v469, %v473
        %v478 = vsel %vm477, 1, 0
        %v479 = vadd.s32 %v469, %v473
        %v480 = vadd.s32 %v472, %v478
        %vm481 = vc.u32 %v479, %v475
        %v482 = vsel %vm481, 1, 0
        %v483 = vadd.s32 %v479, %v475
        %v484 = vadd.s32 %v480, %v482
        %v485 = vadd.s32 %v484, %v474
        %v486 = vadd.s32 %v485, %v476
        %v487 = vmul.u32 %v442, %v433
        %v488 = vadd.s32 %v464, %v483
        %vm489 = vc.u32 %v464, %v483
        %v490 = vadd.s32 %v486, 1
        %v491 = vsel %vm489, %v490, %v486
        %v492 = vadd.s32 %v487, %v491
        %v493 = vadd.s32 %v492, 536870912
        %v494 = vshrl.u32 %v493, 30
        %v495 = vshll.u32 %v494, 30
        %v496 = vsub.s32 %v492, %v495
        %vm497 = vcmp.lt.s32.totalorder %v496, 0
        %v498 = vsub.s32 0, %v496
        %v499 = vsel %vm497, %v498, %v496
        %v500 = vclz %v499
        %v501 = vsub.s32 %v500, 2
        %vm502 = vcmp.gt.s32.totalorder 0, %v501
        %v503 = vsel %vm502, 0, %v501
        %v504 = vsub.s32 32, %v503
        %v505 = vshll.u32 %v496, %v503
        %v506 = vshrl.u32 %v488, %v504
        %v507 = vor.u32 %v505, %v506
        %v508 = vsub.s32 4294967266, %v503
        %v509 = vadd.s32 %v508, 127
        %v510 = vshll.u32 %v509, 23
        %v511 = vor.u32 4788187, %v510
        %v512 = vand.u32 2147483647, %v511
        %v514 = vcvt.s32.f32 %v507
        %v515 = vmul.f32 %v514, %v512
        %v516 = vxor.u32 %v515, 2147483648
        %v517 = vsel %vm396, %v516, %v515
        %v518 = vsub.s32 4, %v494
        %v519 = vsel %vm396, %v518, %v494
        %v520 = vsel %vm395, %v388, %v517
        %v521 = vsel %vm395, 0, %v519
        %v522 = vmul.f32 %v520, %v520
        %v523 = vmul.f32 %v522, -0.001358992
        %v524 = vadd.f32 %v523, 0.041655596
        %v525 = vmul.f32 %v522, %v524
        %v526 = vadd.f32 %v525, -0.4999988
        %v527 = vmul.f32 %v522, %v526
        %v528 = vadd.f32 1.0, %v527
        %v529 = vmul.f32 %v520, %v520
        %v530 = vmul.f32 %v529, -0.00019511016
        %v531 = vadd.f32 %v530, 0.008332121
        %v532 = vmul.f32 %v529, %v531
        %v533 = vadd.f32 %v532, -0.16666654
        %v534 = vmul.f32 %v529, %v533
        %v535 = vadd.f32 %v534, 1.0
        %v536 = vmul.f32 %v535, %v520
        %vm537 = vweird.f32 %v388
        %v538 = vadd.s32 %v521, 3
        %v539 = vand.u32 %v538, 3
        %vm540 = vcmp.lt.s32.totalorder %v539, 2
        %vm541 = vcmp.eq.s32.totalorder %v539, 0
        %v542 = vxor.u32 %v536, 2147483648
        %v543 = vsel %vm541, %v528, %v542
        %vm544 = vcmp.eq.s32.totalorder %v539, 2
        %v545 = vxor.u32 %v528, 2147483648
        %v546 = vsel %vm544, %v545, %v536
        %v547 = vsel %vm540, %v543, %v546
        %v548 = vsel %vm537, nan, %v547
        %v549 = vand.u32 2147483647, %v392
        %vm550 = vcmp.le.f32.partialorder %v549, 0.7853982
        %vm551 = vcmp.lt.s32.totalorder %v392, 0
        %v552 = vand.u32 %v392, 2139095040
        %v553 = vshrl.u32 %v552, 23
        %v554 = vsub.s32 %v553, 127
        %v555 = vand.u32 2147483647, %v392
        %v556 = vand.u32 %v555, 8388607
        %v557 = vor.u32 %v556, 8388608
        %v558 = vsub.s32 0, %v557
        %v559 = vadd.s32 %v554, 1
        %vm560 = vcmp.gt.s32.totalorder %v559, 0
        %v561 = vsel %vm560, %v559, 0
        %v562 = vshrl.u32 %v561, 5
        %v563 = vand.u32 %v561, 31
        %v564 = vsub.s32 32, %v563
        %v565 = vshrl.u32 683565275, %v564
        %v566 = vshll.u32 683565275, %v563
        %v567 = vshrl.u32 2475754826, %v564
        %v568 = vor.u32 %v566, %v567
        %v569 = vshll.u32 2475754826, %v563
        %v570 = vshrl.u32 2131351028, %v564
        %v571 = vor.u32 %v569, %v570
        %v572 = vshll.u32 2131351028, %v563
        %v573 = vshrl.u32 2102212464, %v564
        %v574 = vor.u32 %v572, %v573
        %v575 = vshll.u32 2102212464, %v563
        %v576 = vshrl.u32 920167782, %v564
        %v577 = vor.u32 %v575, %v576
        %v578 = vshll.u32 920167782, %v563
        %v579 = vshrl.u32 1326507024, %v564
        %v580 = vor.u32 %v578, %v579
        %vm581 = vcmp.lt.s32.totalorder %v562, 1
        %vm582 = vcmp.lt.s32.totalorder %v562, 2
        %vm583 = vcmp.lt.s32.totalorder %v562, 3
        %vm584 = vcmp.lt.s32.totalorder %v562, 4
        %v585 = vsel %vm581, %v565, %v568
        %v586 = vsel %vm584, %v574, 2102212464
        %v587 = vsel %vm583, %v571, %v586
        %v588 = vsel %vm582, %v585, %v587
        %v589 = vsel %vm581, %v568, %v571
        %v590 = vsel %vm584, %v577, 920167782
        %v591 = vsel %vm583, %v574, %v590
        %v592 = vsel %vm582, %v589, %v591
        %v593 = vsel %vm581, %v571, %v574
        %v594 = vsel %vm584, %v580, 1326507024
        %v595 = vsel %vm583, %v577, %v594
        %v596 = vsel %vm582, %v593, %v595
        %v597 = vshll.u32 %v557, 8
        %v598 = vand.u32 %v597, 65535
        %v599 = vshrl.u32 %v597, 16
        %v600 = vand.u32 %v596, 65535
        %v601 = vshrl.u32 %v596, 16
        %v602 = vmul.u32 %v598, %v600
        %v603 = vmul.u32 %v598, %v601
        %v604 = vmul.u32 %v599, %v600
        %v605 = vmul.u32 %v599, %v601
        %v606 = vshll.u32 %v603, 16
        %v607 = vshrl.u32 %v603, 16
        %v608 = vshll.u32 %v604, 16
        %v609 = vshrl.u32 %v604, 16
        %vm610 = vc.u32 %v602, %v606
        %v611 = vsel %vm610, 1, 0
        %v612 = vadd.s32 %v602, %v606
        %v613 = vadd.s32 %v605, %v611
        %vm614 = vc.u32 %v612, %v608
        %v615 = vsel %vm614, 1, 0
        %v616 = vadd.s32 %v612, %v608
        %v617 = vadd.s32 %v613, %v615
        %v618 = vadd.s32 %v617, %v607
        %v619 = vadd.s32 %v618, %v609
        %v620 = vand.u32 %v597, 65535
        %v621 = vshrl.u32 %v597, 16
        %v622 = vand.u32 %v592, 65535
        %v623 = vshrl.u32 %v592, 16
        %v624 = vmul.u32 %v620, %v622
        %v625 = vmul.u32 %v620, %v623
        %v626 = vmul.u32 %v621, %v622
        %v627 = vmul.u32 %v621, %v623
        %v628 = vshll.u32 %v625, 16
        %v629 = vshrl.u32 %v625, 16
        %v630 = vshll.u32 %v626, 16
        %v631 = vshrl.u32 %v626, 16
        %vm632 = vc.u32 %v624, %v628
        %v633 = vsel %vm632, 1, 0
        %v634 = vadd.s32 %v624, %v628
        %v635 = vadd.s32 %v627, %v633
        %vm636 = vc.u32 %v634, %v630
        %v637 = vsel %vm636, 1, 0
        %v638 = vadd.s32 %v634, %v630
        %v639 = vadd.s32 %v635, %v637
        %v640 = vadd.s32 %v639, %v629
        %v641 = vadd.s32 %v640, %v631
        %v642 = vmul.u32 %v597, %v588
        %v643 = vadd.s32 %v619, %v638
        %vm644 = vc.u32 %v619, %v638
        %v645 = vadd.s32 %v641, 1
        %v646 = vsel %vm644, %v645, %v641
        %v647 = vadd.s32 %v642, %v646
        %v648 = vadd.s32 %v647, 536870912
        %v649 = vshrl.u32 %v648, 30
        %v650 = vshll.u32 %v649, 30
        %v651 = vsub.s32 %v647, %v650
        %vm652 = vcmp.lt.s32.totalorder %v651, 0
        %v653 = vsub.s32 0, %v651
        %v654 = vsel %vm652, %v653, %v651
        %v655 = vclz %v654
        %v656 = vsub.s32 %v655, 2
        %vm657 = vcmp.gt.s32.totalorder 0, %v656
        %v658 = vsel %vm657, 0, %v656
        %v659 = vsub.s32 32, %v658
        %v660 = vshll.u32 %v651, %v658
        %v661 = vshrl.u32 %v643, %v659
        %v662 = vor.u32 %v660, %v661
        %v663 = vsub.s32 4294967266, %v658
        %v664 = vadd.s32 %v663, 127
        %v665 = vshll.u32 %v664, 23
        %v666 = vor.u32 4788187, %v665
        %v667 = vand.u32 2147483647, %v666
        %v669 = vcvt.s32.f32 %v662
        %v670 = vmul.f32 %v669, %v667
        %v671 = vxor.u32 %v670, 2147483648
        %v672 = vsel %vm551, %v671, %v670
        %v673 = vsub.s32 4, %v649
        %v674 = vsel %vm551, %v673, %v649
        %v675 = vsel %vm550, %v392, %v672
        %v676 = vsel %vm550, 0, %v674
        %v677 = vmul.f32 %v675, %v675
        %v678 = vmul.f32 %v677, -0.001358992
        %v679 = vadd.f32 %v678, 0.041655596
        %v680 = vmul.f32 %v677, %v679
        %v681 = vadd.f32 %v680, -0.4999988
        %v682 = vmul.f32 %v677, %v681
        %v683 = vadd.f32 1.0, %v682
        %v684 = vmul.f32 %v675, %v675
        %v685 = vmul.f32 %v684, -0.00019511016
        %v686 = vadd.f32 %v685, 0.008332121
        %v687 = vmul.f32 %v684, %v686
        %v688 = vadd.f32 %v687, -0.16666654
        %v689 = vmul.f32 %v684, %v688
        %v690 = vadd.f32 %v689, 1.0
        %v691 = vmul.f32 %v690, %v675
        %vm692 = vweird.f32 %v392
        %v693 = vadd.s32 %v676, 3
        %v694 = vand.u32 %v693, 3
        %vm695 = vcmp.lt.s32.totalorder %v694, 2
        %vm696 = vcmp.eq.s32.totalorder %v694, 0
        %v697 = vxor.u32 %v691, 2147483648
        %v698 = vsel %vm696, %v683, %v697
        %vm699 = vcmp.eq.s32.totalorder %v694, 2
        %v700 = vxor.u32 %v683, 2147483648
        %v701 = vsel %vm699, %v700, %v691
        %v702 = vsel %vm695, %v698, %v701
        %v703 = vsel %vm692, nan, %v702
        %v704 = vld [vmem:[%s3] sm:$0x1]
        %vm705 = vcmp.ne.s32.totalorder %v704, 0
        %v706 = vsel %vm705, 1, 0
        %v707 = vperm.slane %v706, 0
        %vm708 = vcmp.eq.s32.totalorder %v707, 1
        %v709 = vsel %vm708, %v388, %v548
        %v710 = vsel %vm708, %v392, %v703
        %vm711 = vcmask 515072
        %712 = vst.msk [vmem:[%s191] sm:$0xff] %vm711, %v709
        %713 = vst.msk [vmem:[%s191 + $0x8] sm:$0xff] %vm711, %v710
        %s714 = sand.u32 %s115, 1
        %s715 = scalar_lea.sflag [#allocation3], %s714
        %s716 = sand.u32 %s115, 1
        %s717 = smul.addr %s716, 16
        %s718 = scalar_lea.vmem [#allocation2], %s717
        // Predicated region
        $region37: #{tpu_custom_call.1} parent=35 // pred_check
          %p719 = pneg %p125
        $region38: #{tpu_custom_call.1} parent=35 // pred_check_branch
          %721 = sbr.rel (%p719) target = $region40
        $region39: #{tpu_custom_call.1} parent=35 // pred_region
          %s722 = smul.u32 2, %s18
          %724 = vsyncadd %s715, 0
          %s725 = smul.addr %s722, 8
          %s726 = scalar_lea.hbm %s4, %s725
          %s727 = sshll.u32 %s718, 4
          %s728 = int_to_ptr.vmem [resolvable:$true] %s727
          %s729 = sshll.u32 %s726, 4
          %s730 = int_to_ptr.hbm [resolvable:$true] %s729
          %735 = dma.vmem_to_hbm [thread:$0]  %s728, 256, %s730, %s715, 128, 128, 8
        $region40: #{tpu_custom_call.1} parent=35 // pred_fallthru
          _
      $region36: #{tpu_custom_call.1} parent=5 // pred_fallthru
        _
      %p736 = scmp.le.s32.totalorder 2, %s13
      // Predicated region
      $region41: #{tpu_custom_call.1} parent=5 // pred_check
        %p737 = pneg %p736
      $region42: #{tpu_custom_call.1} parent=5 // pred_check_branch
        %739 = sbr.rel (%p737) target = $region44
      $region43: #{tpu_custom_call.1} parent=5 // pred_region
        %s740 = ssub.s32 %s13, 2
        // Predicated region
        $region45: #{tpu_custom_call.1} parent=43 // pred_check
          %p741 = pneg %p131
        $region46: #{tpu_custom_call.1} parent=43 // pred_check_branch
          %743 = sbr.rel (%p741) target = $region48
        $region47: #{tpu_custom_call.1} parent=43 // pred_region
          %s744 = sand.u32 %s116, 1
          %s745 = scalar_lea.sflag [#allocation3], %s744
          %s746 = sand.u32 %s116, 1
          %s747 = smul.addr %s746, 16
          %s748 = scalar_lea.vmem [#allocation2], %s747
          %750 = dma.done %s745, 256
        $region48: #{tpu_custom_call.1} parent=43 // pred_fallthru
          _
      $region44: #{tpu_custom_call.1} parent=5 // pred_fallthru
        _
    $region6: #{tpu_custom_call.1} parent=1 // loop_footer
      %s17 = sadd.s32 1, %s13
    $region7: #{tpu_custom_call.1} parent=1 // loop_footer_branch
      %12 = sbr.rel target = $region3
    $region8: #{tpu_custom_call.1} parent=1 // loop_exit
      _
    %751 = vsyncpa [#allocation3], 1
    %s752 = scalar_lea.sflag [#allocation3], 1
    %753 = vsyncpa %s752, 1

</llo_original>
